<compile_context>
chip_gen: v7x
topology: tpu7x:2x2x1
jax: 0.10.0
libtpu: 0.0.40
codegen_flags: <defaults>
</compile_context>

<pallas_src>
import math
import re

import jax
import jax.numpy as jnp
import numpy as np
from jax.experimental import pallas as pl
from jax.experimental.pallas import tpu as pltpu


def _tpu_generation():
    """Best-effort TPU generation number (5, 6, 7, ...); 0 if unknown."""
    try:
        kind = jax.devices()[0].device_kind.lower()
    except Exception:
        return 0
    m = re.search(r"v(\d+)", kind)
    return int(m.group(1)) if m else 0


def _pick_block_b(batch, n_cores, cap=4096):
    """Largest multiple-of-128 divisor of `batch` within the cap (leaving at
    least `n_cores` blocks on multi-TensorCore chips when the batch is big
    enough); falls back to a single full-batch block for small/awkward sizes."""
    limit = min(cap, batch)
    if n_cores > 1 and batch >= 2 * 128:
        limit = min(limit, batch // n_cores)
    d = (limit // 128) * 128
    while d >= 128:
        if batch % d == 0:
            return d
        d -= 128
    # Single block: block shape == full array dims, so no 128-alignment needed.
    return batch


def _make_mlp_kernel(n_layers, bf16_act):
    """Kernel factory, specialized for out_dim == 1 (shape=() config).

    Dataflow is transposed vs. the PyTorch module: activations are (features,
    batch) so the batch rides the 128-lane axis.  LayerNorm reduces over the
    sublane (feature) axis and the final store is a lane-dense row.
    """

    def kernel(x_ref, w0_ref, *refs):
        if n_layers > 1:
            w_rest_ref, p_ref, b_ref, out_ref = refs
        else:
            p_ref, b_ref, out_ref = refs
            w_rest_ref = None

        # rhs of the layer-0 matmul: (block_b, in_dim) bf16 (no-op cast if the
        # producer already emits bf16).
        act = x_ref[...].astype(jnp.bfloat16)

        for i in range(n_layers):                      # statically unrolled
            if i == 0:
                # (units, in) x (block_b, in)^T -> (units, block_b); torch-native
                # W goes straight to the MXU (standard A @ B^T contraction).
                h = jax.lax.dot_general(
                    w0_ref[...], act,
                    dimension_numbers=(((1,), (1,)), ((), ())),
                    preferred_element_type=jnp.float32)
            else:
                # (units, units) @ (units, block_b) -> (units, block_b)
                h = jnp.dot(w_rest_ref[i - 1], act.astype(jnp.bfloat16),
                            preferred_element_type=jnp.float32)

            # LayerNorm over the feature (sublane) axis, eps=1e-3.  Single-pass
            # statistics (E[h^2] - mu^2), always in f32.
            mu = jnp.mean(h, axis=0, keepdims=True)                # (1, block_b)
            var = jnp.mean(h * h, axis=0, keepdims=True) - mu * mu
            g = p_ref[:, i:i + 1]                                  # (units, 1)
            b = p_ref[:, n_layers + i:n_layers + i + 1]            # (units, 1)
            h = (h - mu) * jax.lax.rsqrt(var + 1e-3) * g + b

            # SiLU: bf16 on v6e/v7x (native bf16 VPU/EUP, feeds next MXU matmul
            # directly); f32 on v5e (no bf16 VPU/EUP there).
            if bf16_act:
                h = h.astype(jnp.bfloat16)
            act = h * jax.nn.sigmoid(h)                            # (units, block_b)

        # out_dim == 1 head: lane-parallel VPU multiply + sublane reduction,
        # bias from SMEM; result is a lane-dense (1, block_b) row.
        wm = p_ref[:, 2 * n_layers:2 * n_layers + 1]               # (units, 1)
        mean = jnp.sum(act.astype(jnp.float32) * wm, axis=0, keepdims=True)
        mean = mean + b_ref[0, 0]
        out_ref[...] = jnp.tanh(mean)                              # dist='normal'

    return kernel


def mlp_forward(x, layer_weights, ln_gammas, ln_betas, mean_w, mean_b,
                *, min_std=0.1, max_std=1.0, std=1.0, block_b=None,
                bf16_act=None):
    """Whole MLP forward in one Pallas call.

    Weights are torch-native nn.Linear layout: layer_weights[i] is
    (out_features, in_features); mean_w is (out_dim, units); mean_b is (out_dim,).
    The batch axis is a "parallel" grid dimension; inside the kernel the batch
    rides the 128-lane axis so all vector work and the store are lane-dense.
    """
    B, inp_dim = x.shape
    n_layers = len(layer_weights)
    units = layer_weights[0].shape[0]
    out_dim = mean_w.shape[0]
    assert out_dim == 1, "kernel head specialized for shape=() -> out_dim=1"
    # TODO(synk): dict-shaped heads / std='learned' / symlog_inputs branches of
    # the torch module are not exercised by this config and are not implemented.

    gen = _tpu_generation()
    if bf16_act is None:
        bf16_act = gen >= 6          # bf16 VPU/EUP only on v6e/v7x; f32 elsewhere
    n_cores = 2 if gen >= 7 else 1   # v7x: 2 TensorCores -> want >= 2 blocks

    if block_b is None:
        block_b = _pick_block_b(B, n_cores)
    assert B % block_b == 0
    # Blocked (1, block_b) output rows must stay lane-aligned unless unblocked.
    assert block_b == B or block_b % 128 == 0
    grid = (B // block_b,)

    # ---- Pack parameters into a few dense arrays (few DMA descriptors). ----
    w0 = layer_weights[0].astype(jnp.bfloat16)                       # (units, inp)
    # (units, 2L+1) f32: gamma columns, beta columns, mean-head weight column.
    params = jnp.concatenate(
        [jnp.stack(ln_gammas, axis=1),
         jnp.stack(ln_betas, axis=1),
         mean_w.reshape(units, 1)], axis=1).astype(jnp.float32)
    bias = mean_b.reshape(1, 1).astype(jnp.float32)                  # SMEM scalar

    inputs = [x, w0]
    in_specs = [pl.BlockSpec((block_b, inp_dim), lambda i: (i, 0)),
                pl.BlockSpec((units, inp_dim), lambda i: (0, 0))]
    if n_layers > 1:
        w_rest = jnp.stack(layer_weights[1:]).astype(jnp.bfloat16)   # (L-1, u, u)
        inputs.append(w_rest)
        in_specs.append(
            pl.BlockSpec((n_layers - 1, units, units), lambda i: (0, 0, 0)))
    inputs += [params, bias]
    in_specs += [pl.BlockSpec((units, 2 * n_layers + 1), lambda i: (0, 0)),
                 pl.BlockSpec(memory_space=pltpu.MemorySpace.SMEM)]

    # Lane-dense output: one (1, block_b) row per grid step (unmasked 128-lane
    # stores); reshaped back to (B, 1) in the wrapper (free, same linearization).
    out_specs = pl.BlockSpec((1, block_b), lambda i: (0, i))
    out_shape = jax.ShapeDtypeStruct((1, B), jnp.float32)

    mean_row = pl.pallas_call(
        _make_mlp_kernel(n_layers, bf16_act),
        grid=grid,
        in_specs=in_specs,
        out_specs=out_specs,
        out_shape=out_shape,
        compiler_params=pltpu.CompilerParams(
            dimension_semantics=("parallel",)),
    )(*inputs)
    mean = mean_row.reshape(B, out_dim)

    # std is a trace-time constant -> no on-chip work, no second kernel output.
    # TODO(synk): if std ever becomes learned/traced, it must move into the kernel.
    std_scalar = (max_std - min_std) * jax.nn.sigmoid(jnp.float32(std) + 2.0) + min_std
    std_out = jnp.full((B, out_dim), std_scalar, dtype=jnp.float32)
    # TODO(synk): the torch module wraps (mean, std) in tools.ContDist /
    # torchd.Normal / Independent; the kernel returns the distribution params.
    return mean, std_out


def _reference_matched(x, layer_weights, ln_gammas, ln_betas, mean_w, mean_b,
                       *, bf16_act):
    """Pure-JAX reference mirroring the kernel math (transposed dataflow, bf16
    MXU operands, single-pass f32 LayerNorm, gated SiLU dtype)."""
    n_layers = len(layer_weights)
    act = x.astype(jnp.bfloat16)
    for i in range(n_layers):
        w = layer_weights[i].astype(jnp.bfloat16)
        if i == 0:
            h = jax.lax.dot_general(w, act, (((1,), (1,)), ((), ())),
                                    preferred_element_type=jnp.float32)
        else:
            h = jnp.dot(w, act.astype(jnp.bfloat16),
                        preferred_element_type=jnp.float32)
        mu = jnp.mean(h, axis=0, keepdims=True)
        var = jnp.mean(h * h, axis=0, keepdims=True) - mu * mu
        g = ln_gammas[i].reshape(-1, 1)
        b = ln_betas[i].reshape(-1, 1)
        h = (h - mu) * jax.lax.rsqrt(var + 1e-3) * g + b
        if bf16_act:
            h = h.astype(jnp.bfloat16)
        act = h * jax.nn.sigmoid(h)
    wm = mean_w.reshape(-1, 1).astype(jnp.float32)            # (units, 1)
    mean = jnp.sum(act.astype(jnp.float32) * wm, axis=0, keepdims=True) \
        + mean_b.reshape(1, 1)
    return jnp.tanh(mean).reshape(-1, 1)                      # (B, 1)


def _reference_module_f32(x, layer_weights, ln_gammas, ln_betas, mean_w, mean_b,
                          *, min_std=0.1, max_std=1.0, std=1.0):
    """Module-faithful f32 reference (PyTorch MLP semantics, torch-native W)."""
    h = x.astype(jnp.float32)
    for w, g, b in zip(layer_weights, ln_gammas, ln_betas):
        h = h @ w.T                                            # Linear, no bias
        mu = jnp.mean(h, axis=-1, keepdims=True)
        var = jnp.mean((h - mu) ** 2, axis=-1, keepdims=True)
        h = (h - mu) / jnp.sqrt(var + 1e-3) * g + b
        h = h * jax.nn.sigmoid(h)
    mean = jnp.tanh(h @ mean_w.T + mean_b)
    s = (max_std - min_std) * jax.nn.sigmoid(jnp.float32(std) + 2.0) + min_std
    return mean, jnp.full_like(mean, s)


if __name__ == "__main__":
    # Small config consistent with the module: inp_dim=32, units=32, layers=2,
    # shape=() -> out_dim=1, dist='normal', std=1.0, norm=True, act=SiLU.
    B, INP, UNITS, LAYERS, OUT = 8, 32, 32, 2, 1

    key = jax.random.PRNGKey(0)
    keys = jax.random.split(key, LAYERS + 2)

    # The producer emits bf16 directly (halves the only O(B) HBM stream); the
    # kernel also accepts f32 inputs.
    x = jax.random.normal(keys[0], (B, INP), dtype=jnp.bfloat16)

    layer_weights, ln_gammas, ln_betas = [], [], []
    in_dim = INP
    for i in range(LAYERS):
        # torch-native nn.Linear layout: (out_features, in_features).
        w = jax.random.normal(keys[1 + i], (UNITS, in_dim), jnp.float32) \
            * (1.0 / math.sqrt(in_dim))
        layer_weights.append(w)
        ln_gammas.append(jnp.ones((UNITS,), jnp.float32))
        ln_betas.append(jnp.zeros((UNITS,), jnp.float32))
        in_dim = UNITS

    mean_w = jax.random.normal(keys[1 + LAYERS], (OUT, UNITS), jnp.float32) \
        * (1.0 / math.sqrt(UNITS))
    mean_b = jnp.zeros((OUT,), jnp.float32)

    bf16_act = _tpu_generation() >= 6

    mean, std_out = mlp_forward(x, layer_weights, ln_gammas, ln_betas,
                                mean_w, mean_b, bf16_act=bf16_act)
    jax.block_until_ready((mean, std_out))

    # Tight check: kernel vs a pure-JAX reference implementing identical math.
    ref_matched = _reference_matched(x, layer_weights, ln_gammas, ln_betas,
                                     mean_w, mean_b, bf16_act=bf16_act)
    if bf16_act:
        # bf16 SiLU may round differently between Mosaic and XLA; bound by a
        # few bf16 ulps propagated through the head reduction.
        np.testing.assert_allclose(np.asarray(mean), np.asarray(ref_matched),
                                   atol=3e-2, rtol=0)
    else:
        np.testing.assert_allclose(np.asarray(mean), np.asarray(ref_matched),
                                   atol=5e-5, rtol=1e-5)

    # Semantic sanity check vs the module-faithful f32 math; the loose tolerance
    # only bounds the deliberate bf16 (MXU-operand / activation) precision drift.
    ref_mean_f32, ref_std = _reference_module_f32(
        x, layer_weights, ln_gammas, ln_betas, mean_w, mean_b)
    np.testing.assert_allclose(np.asarray(mean), np.asarray(ref_mean_f32),
                               atol=8e-2, rtol=0)
    np.testing.assert_allclose(np.asarray(std_out), np.asarray(ref_std),
                               atol=1e-6, rtol=1e-6)

    print("KERNEL_OK")
</pallas_src>

<mosaic_0001>
module attributes {stable_mosaic.version = 11 : i64} {
  func.func @kernel(%arg0: i32, %arg1: memref<8x32xbf16, #tpu.memory_space<vmem>>, %arg2: memref<32x32xbf16, #tpu.memory_space<vmem>>, %arg3: memref<1x32x32xbf16, #tpu.memory_space<vmem>>, %arg4: memref<32x5xf32, #tpu.memory_space<vmem>>, %arg5: memref<1x1xf32, #tpu.memory_space<smem>>, %arg6: memref<1x8xf32, #tpu.memory_space<vmem>>) attributes {dimension_semantics = [#tpu.dimension_semantics<parallel>], iteration_bounds = array<i64: 1>, scalar_prefetch = 0 : i64, scratch_operands = 0 : i64, tpu.core_type = #tpu.core_type<tc>, window_params = [{transform_indices = @transform_0, window_bounds = array<i64: 8, 32>}, {pipeline_mode = #tpu.pipeline_mode<synchronous>, transform_indices = @transform_1, window_bounds = array<i64: 32, 32>}, {pipeline_mode = #tpu.pipeline_mode<synchronous>, transform_indices = @transform_2, window_bounds = array<i64: 1, 32, 32>}, {pipeline_mode = #tpu.pipeline_mode<synchronous>, transform_indices = @transform_3, window_bounds = array<i64: 32, 5>}, {transform_indices = @transform_4, window_bounds = array<i64: 1, 1>}, {transform_indices = @transform_5, window_bounds = array<i64: 1, 8>}]} {
    %c0 = arith.constant 0 : index
    %c0_0 = arith.constant 0 : index
    %0 = vector.load %arg1[%c0, %c0_0] : memref<8x32xbf16, #tpu.memory_space<vmem>>, vector<8x32xbf16>
    %c0_1 = arith.constant 0 : index
    %c0_2 = arith.constant 0 : index
    %1 = vector.load %arg2[%c0_1, %c0_2] : memref<32x32xbf16, #tpu.memory_space<vmem>>, vector<32x32xbf16>
    %cst = arith.constant dense<0.000000e+00> : vector<32x8xf32>
    %2 = tpu.matmul %1, %0, %cst {dimension_numbers = #tpu.dot_dimension_numbers<[1], [1], [0], [0], [0, 0, 1, 0], [], []>} : vector<32x32xbf16>, vector<8x32xbf16>, vector<32x8xf32> -> vector<32x8xf32>
    %cst_3 = arith.constant dense<0.000000e+00> : vector<8xf32>
    %3 = vector.multi_reduction <add>, %2, %cst_3 [0] : vector<32x8xf32> to vector<8xf32>
    %4 = vector.shape_cast %3 : vector<8xf32> to vector<1x8xf32>
    %cst_4 = arith.constant 3.200000e+01 : f32
    %5 = vector.broadcast %cst_4 : f32 to vector<1x8xf32>
    %6 = arith.divf %4, %5 : vector<1x8xf32>
    %7 = arith.mulf %2, %2 : vector<32x8xf32>
    %cst_5 = arith.constant dense<0.000000e+00> : vector<8xf32>
    %8 = vector.multi_reduction <add>, %7, %cst_5 [0] : vector<32x8xf32> to vector<8xf32>
    %9 = vector.shape_cast %8 : vector<8xf32> to vector<1x8xf32>
    %cst_6 = arith.constant 3.200000e+01 : f32
    %10 = vector.broadcast %cst_6 : f32 to vector<1x8xf32>
    %11 = arith.divf %9, %10 : vector<1x8xf32>
    %12 = arith.mulf %6, %6 : vector<1x8xf32>
    %13 = arith.subf %11, %12 : vector<1x8xf32>
    %c0_7 = arith.constant 0 : index
    %c0_8 = arith.constant 0 : index
    %14 = vector.load %arg4[%c0_7, %c0_8] : memref<32x5xf32, #tpu.memory_space<vmem>>, vector<32x1xf32>
    %c0_9 = arith.constant 0 : index
    %c2 = arith.constant 2 : index
    %15 = vector.load %arg4[%c0_9, %c2] : memref<32x5xf32, #tpu.memory_space<vmem>>, vector<32x1xf32>
    %16 = vector.broadcast %6 : vector<1x8xf32> to vector<32x8xf32>
    %17 = arith.subf %2, %16 : vector<32x8xf32>
    %cst_10 = arith.constant 1.000000e-03 : f32
    %18 = vector.broadcast %cst_10 : f32 to vector<1x8xf32>
    %19 = arith.addf %13, %18 : vector<1x8xf32>
    %20 = math.rsqrt %19 : vector<1x8xf32>
    %21 = vector.broadcast %20 : vector<1x8xf32> to vector<32x8xf32>
    %22 = arith.mulf %17, %21 : vector<32x8xf32>
    %23 = vector.broadcast %14 : vector<32x1xf32> to vector<32x8xf32>
    %24 = arith.mulf %22, %23 : vector<32x8xf32>
    %25 = vector.broadcast %15 : vector<32x1xf32> to vector<32x8xf32>
    %26 = arith.addf %24, %25 : vector<32x8xf32>
    %27 = arith.negf %26 : vector<32x8xf32>
    %28 = math.exp %27 : vector<32x8xf32>
    %cst_11 = arith.constant 1.000000e+00 : f32
    %29 = vector.broadcast %cst_11 : f32 to vector<32x8xf32>
    %30 = arith.addf %29, %28 : vector<32x8xf32>
    %31 = arith.divf %29, %30 : vector<32x8xf32>
    %32 = arith.mulf %26, %31 : vector<32x8xf32>
    %c0_12 = arith.constant 0 : index
    %c0_13 = arith.constant 0 : index
    %c0_14 = arith.constant 0 : index
    %33 = vector.load %arg3[%c0_12, %c0_13, %c0_14] : memref<1x32x32xbf16, #tpu.memory_space<vmem>>, vector<1x32x32xbf16>
    %34 = vector.shape_cast %33 : vector<1x32x32xbf16> to vector<32x32xbf16>
    %35 = arith.truncf %32 : vector<32x8xf32> to vector<32x8xbf16>
    %cst_15 = arith.constant dense<0.000000e+00> : vector<32x8xf32>
    %36 = tpu.matmul %34, %35, %cst_15 {dimension_numbers = #tpu.dot_dimension_numbers<[1], [0], [0], [1], [0, 0, 1, 1], [], []>} : vector<32x32xbf16>, vector<32x8xbf16>, vector<32x8xf32> -> vector<32x8xf32>
    %cst_16 = arith.constant dense<0.000000e+00> : vector<8xf32>
    %37 = vector.multi_reduction <add>, %36, %cst_16 [0] : vector<32x8xf32> to vector<8xf32>
    %38 = vector.shape_cast %37 : vector<8xf32> to vector<1x8xf32>
    %cst_17 = arith.constant 3.200000e+01 : f32
    %39 = vector.broadcast %cst_17 : f32 to vector<1x8xf32>
    %40 = arith.divf %38, %39 : vector<1x8xf32>
    %41 = arith.mulf %36, %36 : vector<32x8xf32>
    %cst_18 = arith.constant dense<0.000000e+00> : vector<8xf32>
    %42 = vector.multi_reduction <add>, %41, %cst_18 [0] : vector<32x8xf32> to vector<8xf32>
    %43 = vector.shape_cast %42 : vector<8xf32> to vector<1x8xf32>
    %cst_19 = arith.constant 3.200000e+01 : f32
    %44 = vector.broadcast %cst_19 : f32 to vector<1x8xf32>
    %45 = arith.divf %43, %44 : vector<1x8xf32>
    %46 = arith.mulf %40, %40 : vector<1x8xf32>
    %47 = arith.subf %45, %46 : vector<1x8xf32>
    %c0_20 = arith.constant 0 : index
    %c1 = arith.constant 1 : index
    %48 = vector.load %arg4[%c0_20, %c1] : memref<32x5xf32, #tpu.memory_space<vmem>>, vector<32x1xf32>
    %c0_21 = arith.constant 0 : index
    %c3 = arith.constant 3 : index
    %49 = vector.load %arg4[%c0_21, %c3] : memref<32x5xf32, #tpu.memory_space<vmem>>, vector<32x1xf32>
    %50 = vector.broadcast %40 : vector<1x8xf32> to vector<32x8xf32>
    %51 = arith.subf %36, %50 : vector<32x8xf32>
    %cst_22 = arith.constant 1.000000e-03 : f32
    %52 = vector.broadcast %cst_22 : f32 to vector<1x8xf32>
    %53 = arith.addf %47, %52 : vector<1x8xf32>
    %54 = math.rsqrt %53 : vector<1x8xf32>
    %55 = vector.broadcast %54 : vector<1x8xf32> to vector<32x8xf32>
    %56 = arith.mulf %51, %55 : vector<32x8xf32>
    %57 = vector.broadcast %48 : vector<32x1xf32> to vector<32x8xf32>
    %58 = arith.mulf %56, %57 : vector<32x8xf32>
    %59 = vector.broadcast %49 : vector<32x1xf32> to vector<32x8xf32>
    %60 = arith.addf %58, %59 : vector<32x8xf32>
    %61 = arith.negf %60 : vector<32x8xf32>
    %62 = math.exp %61 : vector<32x8xf32>
    %cst_23 = arith.constant 1.000000e+00 : f32
    %63 = vector.broadcast %cst_23 : f32 to vector<32x8xf32>
    %64 = arith.addf %63, %62 : vector<32x8xf32>
    %65 = arith.divf %63, %64 : vector<32x8xf32>
    %66 = arith.mulf %60, %65 : vector<32x8xf32>
    %c0_24 = arith.constant 0 : index
    %c4 = arith.constant 4 : index
    %67 = vector.load %arg4[%c0_24, %c4] : memref<32x5xf32, #tpu.memory_space<vmem>>, vector<32x1xf32>
    %68 = vector.broadcast %67 : vector<32x1xf32> to vector<32x8xf32>
    %69 = arith.mulf %66, %68 : vector<32x8xf32>
    %cst_25 = arith.constant dense<0.000000e+00> : vector<8xf32>
    %70 = vector.multi_reduction <add>, %69, %cst_25 [0] : vector<32x8xf32> to vector<8xf32>
    %71 = vector.shape_cast %70 : vector<8xf32> to vector<1x8xf32>
    %c0_26 = arith.constant 0 : index
    %c0_27 = arith.constant 0 : index
    %72 = memref.load %arg5[%c0_26, %c0_27] : memref<1x1xf32, #tpu.memory_space<smem>>
    %73 = vector.broadcast %72 : f32 to vector<1x8xf32>
    %74 = arith.addf %71, %73 : vector<1x8xf32>
    %75 = math.tanh %74 : vector<1x8xf32>
    %c0_28 = arith.constant 0 : index
    %c0_29 = arith.constant 0 : index
    %76 = vector.load %arg6[%c0_28, %c0_29] : memref<1x8xf32, #tpu.memory_space<vmem>>, vector<1x8xf32>
    tpu.vector_store %arg6[%c0_28, %c0_29], %75 {strides = array<i32>} : memref<1x8xf32, #tpu.memory_space<vmem>>, vector<1x8xf32>,
    return
  }
  func.func @transform_0(%arg0: i32) -> (i32, i32) {
    %c0_i32 = arith.constant 0 : i32
    %c0_i32_0 = arith.constant 0 : i32
    return %arg0, %c0_i32 : i32, i32
  }
  func.func @transform_1(%arg0: i32) -> (i32, i32) {
    %c0_i32 = arith.constant 0 : i32
    %c0_i32_0 = arith.constant 0 : i32
    %c0_i32_1 = arith.constant 0 : i32
    return %c0_i32, %c0_i32_0 : i32, i32
  }
  func.func @transform_2(%arg0: i32) -> (i32, i32, i32) {
    %c0_i32 = arith.constant 0 : i32
    %c0_i32_0 = arith.constant 0 : i32
    %c0_i32_1 = arith.constant 0 : i32
    %c0_i32_2 = arith.constant 0 : i32
    return %c0_i32, %c0_i32_0, %c0_i32_1 : i32, i32, i32
  }
  func.func @transform_3(%arg0: i32) -> (i32, i32) {
    %c0_i32 = arith.constant 0 : i32
    %c0_i32_0 = arith.constant 0 : i32
    %c0_i32_1 = arith.constant 0 : i32
    return %c0_i32, %c0_i32_0 : i32, i32
  }
  func.func @transform_4(%arg0: i32) -> (i32, i32) {
    %c0_i32 = arith.constant 0 : i32
    %c0_i32_0 = arith.constant 0 : i32
    %c0_i32_1 = arith.constant 0 : i32
    return %c0_i32, %c0_i32_0 : i32, i32
  }
  func.func @transform_5(%arg0: i32) -> (i32, i32) {
    %c0_i32 = arith.constant 0 : i32
    %c0_i32_0 = arith.constant 0 : i32
    return %c0_i32, %arg0 : i32, i32
  }
}

</mosaic_0001>

<llo_original>
// kernel: tpu_custom_call.1
$region0: #{tpu_custom_call.1}
  #allocation0 [shape = 'u32[]', space=smem, size = 0x4, offset = 0x4, fixed_abs, tag = 'smem constant byte address 0x4 - core index']
  #allocation1 [shape = 'u32[144,128]{1,0:T(1,128)}', space=vmem, size = 0x12000, scoped, tag = 'internal scratch']
  #allocation2 [shape = 'f32[1,1]{1,0:T(1,128)S(6)}', space=smem, size = 0x200, scoped, tag = 'scoped memory for tpu_custom_call.1']
  %s0 = inlined_call_operand.vmem [shape: bf16[8,32], index: 0, kind: input, shape index: {}]
  %s1 = inlined_call_operand.vmem [shape: bf16[32,32], index: 1, kind: input, shape index: {}]
  %s2 = inlined_call_operand.vmem [shape: bf16[1,32,32], index: 2, kind: input, shape index: {}]
  %s3 = inlined_call_operand.vmem [shape: f32[32,5], index: 3, kind: input, shape index: {}]
  %s4 = inlined_call_operand.<no memory space> [shape: f32[1,1], index: 4, kind: input, shape index: {}]
  %s5 = inlined_call_operand.hbm [shape: f32[1,8], index: 5, kind: output, shape index: {}]
  %s6 = sld [smem:[#allocation0]]
  $region30: #{tpu_custom_call.1} parent=0
    _
  %s8 = ssub.s32 1, %s6
  %s9 = scalar_select 0, %s8, %s6
  %10 = sst [smem:[#allocation2]] %s4
  $region1: #{tpu_custom_call.1} parent=0
    #allocation3 [shape = 'u8[512]{0}', space=vmem, size = 0x400, scoped, tag = 'output window, operand 0, single buffered']
    #allocation4 [shape = 's32[1]{0}', space=sflag, size = 0x4, scoped, tag = 'scoped memory for tpu_custom_call.1']
    %11 = vsyncpa [#allocation4], 0
    // Predicated region
    $region2: #{tpu_custom_call.1} parent=1 // pred_check
      _
    $region3: #{tpu_custom_call.1} parent=1 // pred_check_branch
      %13 = sbr.rel (0) target = $region5
    $region4: #{tpu_custom_call.1} parent=1 // pred_region
      _
    $region5: #{tpu_custom_call.1} parent=1 // pred_fallthru
      _
    // Predicated region
    $region6: #{tpu_custom_call.1} parent=1 // pred_check
      _
    $region7: #{tpu_custom_call.1} parent=1 // pred_check_branch
      %15 = sbr.rel (0) target = $region9
    $region8: #{tpu_custom_call.1} parent=1 // pred_region
      _
    $region9: #{tpu_custom_call.1} parent=1 // pred_fallthru
      _
    // Predicated region
    $region10: #{tpu_custom_call.1} parent=1 // pred_check
      _
    $region11: #{tpu_custom_call.1} parent=1 // pred_check_branch
      %17 = sbr.rel (0) target = $region13
    $region12: #{tpu_custom_call.1} parent=1 // pred_region
      _
    $region13: #{tpu_custom_call.1} parent=1 // pred_fallthru
      _
    // Predicated region
    $region14: #{tpu_custom_call.1} parent=1 // pred_check
      _
    $region15: #{tpu_custom_call.1} parent=1 // pred_check_branch
      %19 = sbr.rel (0) target = $region17
    $region16: #{tpu_custom_call.1} parent=1 // pred_region
      _
    $region17: #{tpu_custom_call.1} parent=1 // pred_fallthru
      _
    // Predicated region
    $region18: #{tpu_custom_call.1} parent=1 // pred_check
      _
    $region19: #{tpu_custom_call.1} parent=1 // pred_check_branch
      %21 = sbr.rel (0) target = $region21
    $region20: #{tpu_custom_call.1} parent=1 // pred_region
      _
    $region21: #{tpu_custom_call.1} parent=1 // pred_fallthru
      _
    %v23 = vld [vmem:[%s0] sm:$0xf]
    %v24 = vld [vmem:[%s1] sm:$0xf]
    %v25 = vld [vmem:[%s1 + $0x4] sm:$0xf]
    %v26 = vld [vmem:[%s1 + $0x8] sm:$0xf]
    %v27 = vld [vmem:[%s1 + $0xc] sm:$0xf]
    %v32 = vunpack.c.l.b16 %v24
    %v33 = vunpack.c.l.b16 %v25
    %v34 = vunpack.c.l.b16 %v26
    %v35 = vunpack.c.l.b16 %v27
    %v36 = vpack.c.b16 %v33, %v32
    %v37 = vpack.c.b16 %v35, %v34
    %vm38 = vcmask 261120
    %v40 = vsel %vm38, %v36, 0
    %v43 = vsel %vm38, %v37, 0
    %v46 = vsel %vm38, %v23, 0
    %48 = vmatprep.subr.bf16.mxu0 0
    %49 = vmatpush1.bf16.xpose.msra.mxu0 %v46
    %50 = vmatprep.subr.bf16.mxu0 0
    %51 = vmatpush1.bf16.xpose.msra.mxu0 0
    %52 = vmatprep.subr.bf16.mxu0 0
    %53 = vmatpush1.bf16.xpose.msra.mxu0 0
    %54 = vmatprep.subr.bf16.mxu0 0
    %55 = vmatpush1.bf16.xpose.msra.mxu0 0
    %56 = vmatprep.subr.bf16.mxu0 0
    %57 = vmatpush1.bf16.xpose.msra.mxu0 0
    %58 = vmatprep.subr.bf16.mxu0 0
    %59 = vmatpush1.bf16.xpose.msra.mxu0 0
    %60 = vmatprep.subr.bf16.mxu0 0
    %61 = vmatpush1.bf16.xpose.msra.mxu0 0
    %62 = vmatprep.subr.bf16.mxu0 0
    %63 = vmatpush1.bf16.xpose.msra.mxu0 0
    %64 = vmatprep.subr.bf16.mxu0 0
    %65 = vmatpush1.bf16.xpose.msra.mxu0 0
    %66 = vmatprep.subr.bf16.mxu0 0
    %67 = vmatpush1.bf16.xpose.msra.mxu0 0
    %68 = vmatprep.subr.bf16.mxu0 0
    %69 = vmatpush1.bf16.xpose.msra.mxu0 0
    %70 = vmatprep.subr.bf16.mxu0 0
    %71 = vmatpush1.bf16.xpose.msra.mxu0 0
    %72 = vmatprep.subr.bf16.mxu0 0
    %73 = vmatpush1.bf16.xpose.msra.mxu0 0
    %74 = vmatprep.subr.bf16.mxu0 0
    %75 = vmatpush1.bf16.xpose.msra.mxu0 0
    %76 = vmatprep.subr.bf16.mxu0 0
    %77 = vmatpush1.bf16.xpose.msra.mxu0 0
    %78 = vmatprep.subr.bf16.mxu0 0
    %79 = vmatpush1.bf16.xpose.msra.mxu0 0
    %80 = vmatprep.mubr.bf16.mxu0 0
    %81 = vmatmul.mubr.bf16.gmra.mrb[0].mxu0 %v40
    %v82 = vpop.f32.mrb[0].mxu0
    %v83 = vadd.f32 0.0, %v82
    %v84 = vpop.f32.mrb[0].mxu0
    %v85 = vpop.f32.mrb[0].mxu0
    %v86 = vadd.f32 0.0, %v85
    %v87 = vpop.f32.mrb[0].mxu0
    %88 = vmatprep.mubr.bf16.mxu0 0
    %89 = vmatmul.mubr.bf16.gmra.mrb[0].mxu0 %v43
    %v90 = vpop.f32.mrb[0].mxu0
    %v91 = vadd.f32 0.0, %v90
    %v92 = vpop.f32.mrb[0].mxu0
    %v93 = vpop.f32.mrb[0].mxu0
    %v94 = vadd.f32 0.0, %v93
    %v95 = vpop.f32.mrb[0].mxu0
    %96 = vdwg.mxu0
    %vm97 = vcmask 64512
    %v98 = vsel %vm97, %v83, 0.0
    %v99 = vsel %vm97, %v86, 0.0
    %v100 = vadd.f32 %v98, %v99
    %v101 = vsel %vm97, %v91, 0.0
    %v102 = vadd.f32 %v100, %v101
    %v103 = vsel %vm97, %v94, 0.0
    %v104 = vadd.f32 %v102, %v103
    %v105 = vrot.slane %v104, 4
    %v106 = vadd.f32 %v104, %v105
    %v107 = vrot.slane %v106, 2
    %v108 = vadd.f32 %v106, %v107
    %v109 = vrot.slane %v108, 1
    %v110 = vadd.f32 %v108, %v109
    %v111 = vrcp.pop 32.0
    %v112 = vmul.f32 %v110, %v111
    %v113 = vmul.f32 %v83, %v83
    %v114 = vmul.f32 %v86, %v86
    %v115 = vmul.f32 %v91, %v91
    %v116 = vmul.f32 %v94, %v94
    %v117 = vsel %vm97, %v113, 0.0
    %v118 = vsel %vm97, %v114, 0.0
    %v119 = vadd.f32 %v117, %v118
    %v120 = vsel %vm97, %v115, 0.0
    %v121 = vadd.f32 %v119, %v120
    %v122 = vsel %vm97, %v116, 0.0
    %v123 = vadd.f32 %v121, %v122
    %v124 = vrot.slane %v123, 4
    %v125 = vadd.f32 %v123, %v124
    %v126 = vrot.slane %v125, 2
    %v127 = vadd.f32 %v125, %v126
    %v128 = vrot.slane %v127, 1
    %v129 = vadd.f32 %v127, %v128
    %v130 = vmul.f32 %v129, %v111
    %v131 = vmul.f32 %v112, %v112
    %v132 = vsub.f32 %v130, %v131
    %v133 = vld [vmem:[%s3] sm:$0xff]
    %v134 = vld [vmem:[%s3 + $0x8] sm:$0xff]
    %v135 = vld [vmem:[%s3 + $0x10] sm:$0xff]
    %v136 = vld [vmem:[%s3 + $0x18] sm:$0xff]
    %v137 = vsub.f32 %v83, %v112
    %v138 = vsub.f32 %v86, %v112
    %v139 = vsub.f32 %v91, %v112
    %v140 = vsub.f32 %v94, %v112
    %v141 = vadd.f32 %v132, 0.001
    %v142 = vrsqrt.pop %v141
    %v143 = vmul.f32 %v137, %v142
    %v144 = vmul.f32 %v138, %v142
    %v145 = vmul.f32 %v139, %v142
    %v146 = vmul.f32 %v140, %v142
    %148 = vset.pattern.permute.xlu0 0
    %149 = vperm.xlu0 %148, %v133
    %v150 = vpop.permute.xlu0 %149
    %153 = vset.pattern.permute.xlu0 0
    %154 = vperm.xlu0 %153, %v134
    %v155 = vpop.permute.xlu0 %154
    %158 = vset.pattern.permute.xlu0 0
    %159 = vperm.xlu0 %158, %v135
    %v160 = vpop.permute.xlu0 %159
    %163 = vset.pattern.permute.xlu0 0
    %164 = vperm.xlu0 %163, %v136
    %v165 = vpop.permute.xlu0 %164
    %v167 = vmul.f32 %v143, %v150
    %v168 = vmul.f32 %v144, %v155
    %v169 = vmul.f32 %v145, %v160
    %v170 = vmul.f32 %v146, %v165
    %171 = vset.pattern.permute.xlu0 2
    %172 = vperm.xlu0 %171, %v133
    %v173 = vpop.permute.xlu0 %172
    %175 = vset.pattern.permute.xlu0 2
    %176 = vperm.xlu0 %175, %v134
    %v177 = vpop.permute.xlu0 %176
    %179 = vset.pattern.permute.xlu0 2
    %180 = vperm.xlu0 %179, %v135
    %v181 = vpop.permute.xlu0 %180
    %183 = vset.pattern.permute.xlu0 2
    %184 = vperm.xlu0 %183, %v136
    %v185 = vpop.permute.xlu0 %184
    %v187 = vadd.f32 %v167, %v173
    %v188 = vadd.f32 %v168, %v177
    %v189 = vadd.f32 %v169, %v181
    %v190 = vadd.f32 %v170, %v185
    %v191 = vxor.u32 %v187, 2147483648
    %v192 = vxor.u32 %v188, 2147483648
    %v193 = vxor.u32 %v189, 2147483648
    %v194 = vxor.u32 %v190, 2147483648
    %v195 = vmul.f32 %v191, 1.442695
    %v196 = vpow.pop %v195
    %v197 = vmul.f32 %v192, 1.442695
    %v198 = vpow.pop %v197
    %v199 = vmul.f32 %v193, 1.442695
    %v200 = vpow.pop %v199
    %v201 = vmul.f32 %v194, 1.442695
    %v202 = vpow.pop %v201
    %v203 = vadd.f32 %v196, 1.0
    %v204 = vadd.f32 %v198, 1.0
    %v205 = vadd.f32 %v200, 1.0
    %v206 = vadd.f32 %v202, 1.0
    %v207 = vrcp.pop %v203
    %v208 = vmul.f32 1.0, %v207
    %v209 = vrcp.pop %v204
    %v210 = vmul.f32 1.0, %v209
    %v211 = vrcp.pop %v205
    %v212 = vmul.f32 1.0, %v211
    %v213 = vrcp.pop %v206
    %v214 = vmul.f32 1.0, %v213
    %v215 = vmul.f32 %v187, %v208
    %v216 = vmul.f32 %v188, %v210
    %v217 = vmul.f32 %v189, %v212
    %v218 = vmul.f32 %v190, %v214
    %v219 = vld [vmem:[%s2] sm:$0xf]
    %v220 = vld [vmem:[%s2 + $0x4] sm:$0xf]
    %v221 = vld [vmem:[%s2 + $0x8] sm:$0xf]
    %v222 = vld [vmem:[%s2 + $0xc] sm:$0xf]
    %v223 = vpack.c.bf16 %v216, %v215
    %v224 = vpack.c.bf16 %v218, %v217
    %v229 = vunpack.c.l.b16 %v219
    %v230 = vunpack.c.l.b16 %v220
    %v231 = vunpack.c.l.b16 %v221
    %v232 = vunpack.c.l.b16 %v222
    %v233 = vpack.c.b16 %v230, %v229
    %v234 = vpack.c.b16 %v232, %v231
    %v236 = vsel %vm38, %v233, 0
    %v239 = vsel %vm38, %v234, 0
    %241 = vmatprep.subr.bf16.mxu0 0
    %242 = vmatpush1.bf16.msra.mxu0 %v223
    %243 = vmatprep.subr.bf16.mxu0 0
    %244 = vmatpush1.bf16.msra.mxu0 %v224
    %245 = vmatprep.subr.bf16.mxu0 0
    %246 = vmatpush1.bf16.msra.mxu0 0
    %247 = vmatprep.subr.bf16.mxu0 0
    %248 = vmatpush1.bf16.msra.mxu0 0
    %249 = vmatprep.subr.bf16.mxu0 0
    %250 = vmatpush1.bf16.msra.mxu0 0
    %251 = vmatprep.subr.bf16.mxu0 0
    %252 = vmatpush1.bf16.msra.mxu0 0
    %253 = vmatprep.subr.bf16.mxu0 0
    %254 = vmatpush1.bf16.msra.mxu0 0
    %255 = vmatprep.subr.bf16.mxu0 0
    %256 = vmatpush1.bf16.msra.mxu0 0
    %257 = vmatprep.subr.bf16.mxu0 0
    %258 = vmatpush1.bf16.msra.mxu0 0
    %259 = vmatprep.subr.bf16.mxu0 0
    %260 = vmatpush1.bf16.msra.mxu0 0
    %261 = vmatprep.subr.bf16.mxu0 0
    %262 = vmatpush1.bf16.msra.mxu0 0
    %263 = vmatprep.subr.bf16.mxu0 0
    %264 = vmatpush1.bf16.msra.mxu0 0
    %265 = vmatprep.subr.bf16.mxu0 0
    %266 = vmatpush1.bf16.msra.mxu0 0
    %267 = vmatprep.subr.bf16.mxu0 0
    %268 = vmatpush1.bf16.msra.mxu0 0
    %269 = vmatprep.subr.bf16.mxu0 0
    %270 = vmatpush1.bf16.msra.mxu0 0
    %271 = vmatprep.subr.bf16.mxu0 0
    %272 = vmatpush1.bf16.msra.mxu0 0
    %273 = vmatprep.mubr.bf16.mxu0 0
    %274 = vmatmul.mubr.bf16.gmra.mrb[0].mxu0 %v236
    %v275 = vpop.f32.mrb[0].mxu0
    %v276 = vadd.f32 0.0, %v275
    %v277 = vpop.f32.mrb[0].mxu0
    %v278 = vpop.f32.mrb[0].mxu0
    %v279 = vadd.f32 0.0, %v278
    %v280 = vpop.f32.mrb[0].mxu0
    %281 = vmatprep.mubr.bf16.mxu0 0
    %282 = vmatmul.mubr.bf16.gmra.mrb[0].mxu0 %v239
    %v283 = vpop.f32.mrb[0].mxu0
    %v284 = vadd.f32 0.0, %v283
    %v285 = vpop.f32.mrb[0].mxu0
    %v286 = vpop.f32.mrb[0].mxu0
    %v287 = vadd.f32 0.0, %v286
    %v288 = vpop.f32.mrb[0].mxu0
    %289 = vdwg.mxu0
    %v290 = vsel %vm97, %v276, 0.0
    %v291 = vsel %vm97, %v279, 0.0
    %v292 = vadd.f32 %v290, %v291
    %v293 = vsel %vm97, %v284, 0.0
    %v294 = vadd.f32 %v292, %v293
    %v295 = vsel %vm97, %v287, 0.0
    %v296 = vadd.f32 %v294, %v295
    %v297 = vrot.slane %v296, 4
    %v298 = vadd.f32 %v296, %v297
    %v299 = vrot.slane %v298, 2
    %v300 = vadd.f32 %v298, %v299
    %v301 = vrot.slane %v300, 1
    %v302 = vadd.f32 %v300, %v301
    %v303 = vmul.f32 %v302, %v111
    %v304 = vmul.f32 %v276, %v276
    %v305 = vmul.f32 %v279, %v279
    %v306 = vmul.f32 %v284, %v284
    %v307 = vmul.f32 %v287, %v287
    %v308 = vsel %vm97, %v304, 0.0
    %v309 = vsel %vm97, %v305, 0.0
    %v310 = vadd.f32 %v308, %v309
    %v311 = vsel %vm97, %v306, 0.0
    %v312 = vadd.f32 %v310, %v311
    %v313 = vsel %vm97, %v307, 0.0
    %v314 = vadd.f32 %v312, %v313
    %v315 = vrot.slane %v314, 4
    %v316 = vadd.f32 %v314, %v315
    %v317 = vrot.slane %v316, 2
    %v318 = vadd.f32 %v316, %v317
    %v319 = vrot.slane %v318, 1
    %v320 = vadd.f32 %v318, %v319
    %v321 = vmul.f32 %v320, %v111
    %v322 = vmul.f32 %v303, %v303
    %v323 = vsub.f32 %v321, %v322
    %v324 = vsub.f32 %v276, %v303
    %v325 = vsub.f32 %v279, %v303
    %v326 = vsub.f32 %v284, %v303
    %v327 = vsub.f32 %v287, %v303
    %v328 = vadd.f32 %v323, 0.001
    %v329 = vrsqrt.pop %v328
    %v330 = vmul.f32 %v324, %v329
    %v331 = vmul.f32 %v325, %v329
    %v332 = vmul.f32 %v326, %v329
    %v333 = vmul.f32 %v327, %v329
    %334 = vset.pattern.permute.xlu0 1
    %335 = vperm.xlu0 %334, %v133
    %v336 = vpop.permute.xlu0 %335
    %338 = vset.pattern.permute.xlu0 1
    %339 = vperm.xlu0 %338, %v134
    %v340 = vpop.permute.xlu0 %339
    %342 = vset.pattern.permute.xlu0 1
    %343 = vperm.xlu0 %342, %v135
    %v344 = vpop.permute.xlu0 %343
    %346 = vset.pattern.permute.xlu0 1
    %347 = vperm.xlu0 %346, %v136
    %v348 = vpop.permute.xlu0 %347
    %v350 = vmul.f32 %v330, %v336
    %v351 = vmul.f32 %v331, %v340
    %v352 = vmul.f32 %v332, %v344
    %v353 = vmul.f32 %v333, %v348
    %354 = vset.pattern.permute.xlu0 3
    %355 = vperm.xlu0 %354, %v133
    %v356 = vpop.permute.xlu0 %355
    %358 = vset.pattern.permute.xlu0 3
    %359 = vperm.xlu0 %358, %v134
    %v360 = vpop.permute.xlu0 %359
    %362 = vset.pattern.permute.xlu0 3
    %363 = vperm.xlu0 %362, %v135
    %v364 = vpop.permute.xlu0 %363
    %366 = vset.pattern.permute.xlu0 3
    %367 = vperm.xlu0 %366, %v136
    %v368 = vpop.permute.xlu0 %367
    %v370 = vadd.f32 %v350, %v356
    %v371 = vadd.f32 %v351, %v360
    %v372 = vadd.f32 %v352, %v364
    %v373 = vadd.f32 %v353, %v368
    %v374 = vxor.u32 %v370, 2147483648
    %v375 = vxor.u32 %v371, 2147483648
    %v376 = vxor.u32 %v372, 2147483648
    %v377 = vxor.u32 %v373, 2147483648
    %v378 = vmul.f32 %v374, 1.442695
    %v379 = vpow.pop %v378
    %v380 = vmul.f32 %v375, 1.442695
    %v381 = vpow.pop %v380
    %v382 = vmul.f32 %v376, 1.442695
    %v383 = vpow.pop %v382
    %v384 = vmul.f32 %v377, 1.442695
    %v385 = vpow.pop %v384
    %v386 = vadd.f32 %v379, 1.0
    %v387 = vadd.f32 %v381, 1.0
    %v388 = vadd.f32 %v383, 1.0
    %v389 = vadd.f32 %v385, 1.0
    %v390 = vrcp.pop %v386
    %v391 = vmul.f32 1.0, %v390
    %v392 = vrcp.pop %v387
    %v393 = vmul.f32 1.0, %v392
    %v394 = vrcp.pop %v388
    %v395 = vmul.f32 1.0, %v394
    %v396 = vrcp.pop %v389
    %v397 = vmul.f32 1.0, %v396
    %v398 = vmul.f32 %v370, %v391
    %v399 = vmul.f32 %v371, %v393
    %v400 = vmul.f32 %v372, %v395
    %v401 = vmul.f32 %v373, %v397
    %402 = vset.pattern.permute.xlu0 4
    %403 = vperm.xlu0 %402, %v133
    %v404 = vpop.permute.xlu0 %403
    %406 = vset.pattern.permute.xlu0 4
    %407 = vperm.xlu0 %406, %v134
    %v408 = vpop.permute.xlu0 %407
    %410 = vset.pattern.permute.xlu0 4
    %411 = vperm.xlu0 %410, %v135
    %v412 = vpop.permute.xlu0 %411
    %414 = vset.pattern.permute.xlu0 4
    %415 = vperm.xlu0 %414, %v136
    %v416 = vpop.permute.xlu0 %415
    %v418 = vmul.f32 %v398, %v404
    %v419 = vmul.f32 %v399, %v408
    %v420 = vmul.f32 %v400, %v412
    %v421 = vmul.f32 %v401, %v416
    %v422 = vsel %vm97, %v418, 0.0
    %v423 = vsel %vm97, %v419, 0.0
    %v424 = vadd.f32 %v422, %v423
    %v425 = vsel %vm97, %v420, 0.0
    %v426 = vadd.f32 %v424, %v425
    %v427 = vsel %vm97, %v421, 0.0
    %v428 = vadd.f32 %v426, %v427
    %v429 = vrot.slane %v428, 4
    %v430 = vadd.f32 %v428, %v429
    %v431 = vrot.slane %v430, 2
    %v432 = vadd.f32 %v430, %v431
    %v433 = vrot.slane %v432, 1
    %v434 = vadd.f32 %v432, %v433
    %s435 = sld [smem:[#allocation2]]
    %v436 = vstv %s435
    %v437 = vadd.f32 %v434, %v436
    %v438 = vtanh.pop %v437
    %vm439 = vcmask 57344
    %440 = vst.msk [vmem:[#allocation3] sm:$0x1] %vm439, %v438
    // Predicated region
    $region22: #{tpu_custom_call.1} parent=1 // pred_check
      _
    $region23: #{tpu_custom_call.1} parent=1 // pred_check_branch
      %442 = sbr.rel (0) target = $region25
    $region24: #{tpu_custom_call.1} parent=1 // pred_region
      %s444 = ssub.s32 16, 16
      %445 = vsyncadd [#allocation4], %s444
      %s447 = sshll.u32 [#allocation3], 4
      %s448 = int_to_ptr.vmem [resolvable:$true] %s447
      %450 = dma.vmem_to_hbm [thread:$0]  %s448, 16, %s5, [#allocation4]
    $region25: #{tpu_custom_call.1} parent=1 // pred_fallthru
      _
    // Predicated region
    $region26: #{tpu_custom_call.1} parent=1 // pred_check
      _
    $region27: #{tpu_custom_call.1} parent=1 // pred_check_branch
      %452 = sbr.rel (0) target = $region29
    $region28: #{tpu_custom_call.1} parent=1 // pred_region
      %453 = dma.done [#allocation4], 16
    $region29: #{tpu_custom_call.1} parent=1 // pred_fallthru
      _
    %454 = vsyncpa [#allocation4], 1

</llo_original>
